<compile_context>
chip_gen: v7x
topology: tpu7x:2x2x1
jax: 0.10.0
libtpu: 0.0.40
codegen_flags: <defaults>
</compile_context>

<pallas_src>
import functools

import jax
import jax.numpy as jnp
from jax import lax
from jax.experimental import pallas as pl
from jax.experimental.pallas import tpu as pltpu

HIDDEN = 256
LN_EPS = 1e-5  # nn.LayerNorm default


def _round_up(x, m):
    return ((x + m - 1) // m) * m


def _layernorm(h, gamma, beta):
    # PyTorch LayerNorm: biased variance over the last dim.
    # One-pass: mean(h) and mean(h*h) reduce independently (can overlap on XLU),
    # rsqrt goes to the EUP slot.
    mu = jnp.mean(h, axis=-1, keepdims=True)
    m2 = jnp.mean(h * h, axis=-1, keepdims=True)
    var = m2 - mu * mu
    inv = lax.rsqrt(var + LN_EPS)
    return (h - mu) * (inv * gamma) + beta


def mlp_kernel(x_ref,
               w1_ref, b1_ref, g1_ref, be1_ref,
               w2_ref, b2_ref, g2_ref, be2_ref,
               w3_ref, b3_ref,
               o_ref, *, matmul_dtype):
    # fc1 -> ln1 -> relu
    x = x_ref[...].astype(matmul_dtype)
    h = jnp.dot(x, w1_ref[...], preferred_element_type=jnp.float32) + b1_ref[...]
    h = jnp.maximum(_layernorm(h, g1_ref[...], be1_ref[...]), 0.0)

    # fc2 -> ln2 -> relu
    h = jnp.dot(h.astype(matmul_dtype), w2_ref[...],
                preferred_element_type=jnp.float32) + b2_ref[...]
    h = jnp.maximum(_layernorm(h, g2_ref[...], be2_ref[...]), 0.0)

    # out (lane-padded to 128 columns; pad columns are zero weights/bias)
    o = jnp.dot(h.astype(matmul_dtype), w3_ref[...],
                preferred_element_type=jnp.float32) + b3_ref[...]
    o_ref[...] = o.astype(o_ref.dtype)


def neural_net_classifier(x, params, *, block_b=512, matmul_dtype=jnp.bfloat16):
    """Fused forward pass of NeuralNetClassifier as a single batch-tiled Pallas kernel.

    x: (B, n_features) float32
    params: dict with w1,b1,g1,be1,w2,b2,g2,be2,w3,b3 (weights in (in,out) layout,
            vectors reshaped to (1, dim)), all float32.
    """
    B, n_features = x.shape
    n_classes = params["w3"].shape[1]

    # --- lane-pad the classifier head to a multiple of 128 (dense vst, full MXU cols)
    nc_pad = _round_up(n_classes, 128)
    w3 = params["w3"]
    b3 = params["b3"]
    if nc_pad != n_classes:
        w3 = jnp.pad(w3, ((0, 0), (0, nc_pad - n_classes)))
        b3 = jnp.pad(b3, ((0, 0), (0, nc_pad - n_classes)))

    # --- batch tiling: TB multiple of 8 (up to block_b), pad B so no tail masking
    tb = min(block_b, _round_up(B, 8))
    b_pad = _round_up(B, tb)
    if b_pad != B:
        x = jnp.pad(x, ((0, b_pad - B), (0, 0)))

    # --- matmul operands in MXU dtype; bias/LN params stay f32
    w1 = params["w1"].astype(matmul_dtype)
    w2 = params["w2"].astype(matmul_dtype)
    w3 = w3.astype(matmul_dtype)

    operands = (
        x,
        w1, params["b1"], params["g1"], params["be1"],
        w2, params["b2"], params["g2"], params["be2"],
        w3, b3,
    )

    def resident_spec(arr):
        nd = arr.ndim
        return pl.BlockSpec(arr.shape, lambda i, nd=nd: (0,) * nd)

    in_specs = [pl.BlockSpec((tb, n_features), lambda i: (i, 0))]
    in_specs += [resident_spec(a) for a in operands[1:]]
    out_spec = pl.BlockSpec((tb, nc_pad), lambda i: (i, 0))

    out = pl.pallas_call(
        functools.partial(mlp_kernel, matmul_dtype=matmul_dtype),
        out_shape=jax.ShapeDtypeStruct((b_pad, nc_pad), jnp.float32),
        grid=(b_pad // tb,),
        in_specs=in_specs,
        out_specs=out_spec,
        compiler_params=pltpu.CompilerParams(
            dimension_semantics=("parallel",),  # batch tiles split across TCs on v7x
        ),
    )(*operands)

    return out[:B, :n_classes]


def init_params(key, n_features, n_classes):
    """Deterministic synthetic parameters matching NeuralNetClassifier.__init__ shapes."""
    ks = jax.random.split(key, 6)

    def linear(kw, kb, fan_in, fan_out):
        bound = 1.0 / jnp.sqrt(jnp.float32(fan_in))
        # Stored as (in, out) so the kernel does x @ W.
        w = jax.random.uniform(kw, (fan_in, fan_out), jnp.float32, -bound, bound)
        b = jax.random.uniform(kb, (1, fan_out), jnp.float32, -bound, bound)
        return w, b

    w1, b1 = linear(ks[0], ks[1], n_features, HIDDEN)
    w2, b2 = linear(ks[2], ks[3], HIDDEN, HIDDEN)
    w3, b3 = linear(ks[4], ks[5], HIDDEN, n_classes)
    return dict(
        w1=w1, b1=b1,
        g1=jnp.ones((1, HIDDEN), jnp.float32), be1=jnp.zeros((1, HIDDEN), jnp.float32),
        w2=w2, b2=b2,
        g2=jnp.ones((1, HIDDEN), jnp.float32), be2=jnp.zeros((1, HIDDEN), jnp.float32),
        w3=w3, b3=b3,
    )


def reference_forward(x, p):
    def ln(h, g, b):
        mu = jnp.mean(h, axis=-1, keepdims=True)
        var = jnp.mean((h - mu) ** 2, axis=-1, keepdims=True)
        return (h - mu) / jnp.sqrt(var + LN_EPS) * g + b

    h = jnp.maximum(ln(x @ p["w1"] + p["b1"], p["g1"], p["be1"]), 0.0)
    h = jnp.maximum(ln(h @ p["w2"] + p["b2"], p["g2"], p["be2"]), 0.0)
    return h @ p["w3"] + p["b3"]


if __name__ == "__main__":
    n_features, n_classes, batch = 32, 10, 8
    key = jax.random.PRNGKey(0)
    kx, kp = jax.random.split(key)

    x = jax.random.normal(kx, (batch, n_features), jnp.float32)
    params = init_params(kp, n_features, n_classes)
    ref = reference_forward(x, params)

    # 1) f32-matmul path: tight check against the f32 reference.
    out_f32 = jax.block_until_ready(
        neural_net_classifier(x, params, matmul_dtype=jnp.float32))
    assert out_f32.shape == (batch, n_classes)
    assert jnp.allclose(out_f32, ref, atol=1e-4, rtol=1e-4), "f32 path mismatch"

    # 2) default bf16-matmul path (MXU-friendly): looser tolerance vs f32 reference.
    out_bf16 = jax.block_until_ready(neural_net_classifier(x, params))
    assert out_bf16.shape == (batch, n_classes)
    assert jnp.allclose(out_bf16, ref, atol=1e-1, rtol=5e-2), "bf16 path mismatch"

    # 3) exercise batch tiling + padding: B=100 with TB=32 -> 4 grid steps, padded tail.
    xb = jax.random.normal(jax.random.PRNGKey(1), (100, n_features), jnp.float32)
    out_tiled = jax.block_until_ready(
        neural_net_classifier(xb, params, block_b=32, matmul_dtype=jnp.float32))
    ref_tiled = reference_forward(xb, params)
    assert out_tiled.shape == (100, n_classes)
    assert jnp.allclose(out_tiled, ref_tiled, atol=1e-4, rtol=1e-4), "tiled path mismatch"

    print("KERNEL_OK")
</pallas_src>

<mosaic_0001>
module attributes {stable_mosaic.version = 11 : i64} {
  func.func @mlp_kernel(%arg0: i32, %arg1: memref<8x32xf32, #tpu.memory_space<vmem>>, %arg2: memref<32x256xf32, #tpu.memory_space<vmem>>, %arg3: memref<1x256xf32, #tpu.memory_space<vmem>>, %arg4: memref<1x256xf32, #tpu.memory_space<vmem>>, %arg5: memref<1x256xf32, #tpu.memory_space<vmem>>, %arg6: memref<256x256xf32, #tpu.memory_space<vmem>>, %arg7: memref<1x256xf32, #tpu.memory_space<vmem>>, %arg8: memref<1x256xf32, #tpu.memory_space<vmem>>, %arg9: memref<1x256xf32, #tpu.memory_space<vmem>>, %arg10: memref<256x128xf32, #tpu.memory_space<vmem>>, %arg11: memref<1x128xf32, #tpu.memory_space<vmem>>, %arg12: memref<8x128xf32, #tpu.memory_space<vmem>>) attributes {dimension_semantics = [#tpu.dimension_semantics<parallel>], iteration_bounds = array<i64: 1>, scalar_prefetch = 0 : i64, scratch_operands = 0 : i64, tpu.core_type = #tpu.core_type<tc>, window_params = [{transform_indices = @transform_0, window_bounds = array<i64: 8, 32>}, {pipeline_mode = #tpu.pipeline_mode<synchronous>, transform_indices = @transform_1, window_bounds = array<i64: 32, 256>}, {pipeline_mode = #tpu.pipeline_mode<synchronous>, transform_indices = @transform_2, window_bounds = array<i64: 1, 256>}, {pipeline_mode = #tpu.pipeline_mode<synchronous>, transform_indices = @transform_3, window_bounds = array<i64: 1, 256>}, {pipeline_mode = #tpu.pipeline_mode<synchronous>, transform_indices = @transform_4, window_bounds = array<i64: 1, 256>}, {pipeline_mode = #tpu.pipeline_mode<synchronous>, transform_indices = @transform_5, window_bounds = array<i64: 256, 256>}, {pipeline_mode = #tpu.pipeline_mode<synchronous>, transform_indices = @transform_6, window_bounds = array<i64: 1, 256>}, {pipeline_mode = #tpu.pipeline_mode<synchronous>, transform_indices = @transform_7, window_bounds = array<i64: 1, 256>}, {pipeline_mode = #tpu.pipeline_mode<synchronous>, transform_indices = @transform_8, window_bounds = array<i64: 1, 256>}, {pipeline_mode = #tpu.pipeline_mode<synchronous>, transform_indices = @transform_9, window_bounds = array<i64: 256, 128>}, {pipeline_mode = #tpu.pipeline_mode<synchronous>, transform_indices = @transform_10, window_bounds = array<i64: 1, 128>}, {transform_indices = @transform_11, window_bounds = array<i64: 8, 128>}]} {
    %c0 = arith.constant 0 : index
    %c0_0 = arith.constant 0 : index
    %0 = vector.load %arg1[%c0, %c0_0] : memref<8x32xf32, #tpu.memory_space<vmem>>, vector<8x32xf32>
    %c0_1 = arith.constant 0 : index
    %c0_2 = arith.constant 0 : index
    %1 = vector.load %arg2[%c0_1, %c0_2] : memref<32x256xf32, #tpu.memory_space<vmem>>, vector<32x256xf32>
    %cst = arith.constant dense<0.000000e+00> : vector<8x256xf32>
    %2 = tpu.matmul %0, %1, %cst {dimension_numbers = #tpu.dot_dimension_numbers<[1], [0], [0], [1], [0, 0, 1, 1], [], []>} : vector<8x32xf32>, vector<32x256xf32>, vector<8x256xf32> -> vector<8x256xf32>
    %c0_3 = arith.constant 0 : index
    %c0_4 = arith.constant 0 : index
    %3 = vector.load %arg3[%c0_3, %c0_4] : memref<1x256xf32, #tpu.memory_space<vmem>>, vector<1x256xf32>
    %4 = vector.broadcast %3 : vector<1x256xf32> to vector<8x256xf32>
    %5 = arith.addf %2, %4 : vector<8x256xf32>
    %c0_5 = arith.constant 0 : index
    %c0_6 = arith.constant 0 : index
    %6 = vector.load %arg4[%c0_5, %c0_6] : memref<1x256xf32, #tpu.memory_space<vmem>>, vector<1x256xf32>
    %c0_7 = arith.constant 0 : index
    %c0_8 = arith.constant 0 : index
    %7 = vector.load %arg5[%c0_7, %c0_8] : memref<1x256xf32, #tpu.memory_space<vmem>>, vector<1x256xf32>
    %cst_9 = arith.constant dense<0.000000e+00> : vector<8xf32>
    %8 = vector.multi_reduction <add>, %5, %cst_9 [1] : vector<8x256xf32> to vector<8xf32>
    %9 = vector.shape_cast %8 : vector<8xf32> to vector<8x1xf32>
    %cst_10 = arith.constant 2.560000e+02 : f32
    %10 = vector.broadcast %cst_10 : f32 to vector<8x1xf32>
    %11 = arith.divf %9, %10 : vector<8x1xf32>
    %12 = arith.mulf %5, %5 : vector<8x256xf32>
    %cst_11 = arith.constant dense<0.000000e+00> : vector<8xf32>
    %13 = vector.multi_reduction <add>, %12, %cst_11 [1] : vector<8x256xf32> to vector<8xf32>
    %14 = vector.shape_cast %13 : vector<8xf32> to vector<8x1xf32>
    %cst_12 = arith.constant 2.560000e+02 : f32
    %15 = vector.broadcast %cst_12 : f32 to vector<8x1xf32>
    %16 = arith.divf %14, %15 : vector<8x1xf32>
    %17 = arith.mulf %11, %11 : vector<8x1xf32>
    %18 = arith.subf %16, %17 : vector<8x1xf32>
    %cst_13 = arith.constant 9.99999974E-6 : f32
    %19 = vector.broadcast %cst_13 : f32 to vector<8x1xf32>
    %20 = arith.addf %18, %19 : vector<8x1xf32>
    %21 = math.rsqrt %20 : vector<8x1xf32>
    %22 = vector.broadcast %11 : vector<8x1xf32> to vector<8x256xf32>
    %23 = arith.subf %5, %22 : vector<8x256xf32>
    %24 = vector.broadcast %21 : vector<8x1xf32> to vector<8x256xf32>
    %25 = vector.broadcast %6 : vector<1x256xf32> to vector<8x256xf32>
    %26 = arith.mulf %24, %25 : vector<8x256xf32>
    %27 = arith.mulf %23, %26 : vector<8x256xf32>
    %28 = vector.broadcast %7 : vector<1x256xf32> to vector<8x256xf32>
    %29 = arith.addf %27, %28 : vector<8x256xf32>
    %cst_14 = arith.constant 0.000000e+00 : f32
    %30 = vector.broadcast %cst_14 : f32 to vector<8x256xf32>
    %31 = arith.maximumf %29, %30 : vector<8x256xf32>
    %c0_15 = arith.constant 0 : index
    %c0_16 = arith.constant 0 : index
    %32 = vector.load %arg6[%c0_15, %c0_16] : memref<256x256xf32, #tpu.memory_space<vmem>>, vector<256x256xf32>
    %cst_17 = arith.constant dense<0.000000e+00> : vector<8x256xf32>
    %33 = tpu.matmul %31, %32, %cst_17 {dimension_numbers = #tpu.dot_dimension_numbers<[1], [0], [0], [1], [0, 0, 1, 1], [], []>} : vector<8x256xf32>, vector<256x256xf32>, vector<8x256xf32> -> vector<8x256xf32>
    %c0_18 = arith.constant 0 : index
    %c0_19 = arith.constant 0 : index
    %34 = vector.load %arg7[%c0_18, %c0_19] : memref<1x256xf32, #tpu.memory_space<vmem>>, vector<1x256xf32>
    %35 = vector.broadcast %34 : vector<1x256xf32> to vector<8x256xf32>
    %36 = arith.addf %33, %35 : vector<8x256xf32>
    %c0_20 = arith.constant 0 : index
    %c0_21 = arith.constant 0 : index
    %37 = vector.load %arg8[%c0_20, %c0_21] : memref<1x256xf32, #tpu.memory_space<vmem>>, vector<1x256xf32>
    %c0_22 = arith.constant 0 : index
    %c0_23 = arith.constant 0 : index
    %38 = vector.load %arg9[%c0_22, %c0_23] : memref<1x256xf32, #tpu.memory_space<vmem>>, vector<1x256xf32>
    %cst_24 = arith.constant dense<0.000000e+00> : vector<8xf32>
    %39 = vector.multi_reduction <add>, %36, %cst_24 [1] : vector<8x256xf32> to vector<8xf32>
    %40 = vector.shape_cast %39 : vector<8xf32> to vector<8x1xf32>
    %cst_25 = arith.constant 2.560000e+02 : f32
    %41 = vector.broadcast %cst_25 : f32 to vector<8x1xf32>
    %42 = arith.divf %40, %41 : vector<8x1xf32>
    %43 = arith.mulf %36, %36 : vector<8x256xf32>
    %cst_26 = arith.constant dense<0.000000e+00> : vector<8xf32>
    %44 = vector.multi_reduction <add>, %43, %cst_26 [1] : vector<8x256xf32> to vector<8xf32>
    %45 = vector.shape_cast %44 : vector<8xf32> to vector<8x1xf32>
    %cst_27 = arith.constant 2.560000e+02 : f32
    %46 = vector.broadcast %cst_27 : f32 to vector<8x1xf32>
    %47 = arith.divf %45, %46 : vector<8x1xf32>
    %48 = arith.mulf %42, %42 : vector<8x1xf32>
    %49 = arith.subf %47, %48 : vector<8x1xf32>
    %cst_28 = arith.constant 9.99999974E-6 : f32
    %50 = vector.broadcast %cst_28 : f32 to vector<8x1xf32>
    %51 = arith.addf %49, %50 : vector<8x1xf32>
    %52 = math.rsqrt %51 : vector<8x1xf32>
    %53 = vector.broadcast %42 : vector<8x1xf32> to vector<8x256xf32>
    %54 = arith.subf %36, %53 : vector<8x256xf32>
    %55 = vector.broadcast %52 : vector<8x1xf32> to vector<8x256xf32>
    %56 = vector.broadcast %37 : vector<1x256xf32> to vector<8x256xf32>
    %57 = arith.mulf %55, %56 : vector<8x256xf32>
    %58 = arith.mulf %54, %57 : vector<8x256xf32>
    %59 = vector.broadcast %38 : vector<1x256xf32> to vector<8x256xf32>
    %60 = arith.addf %58, %59 : vector<8x256xf32>
    %cst_29 = arith.constant 0.000000e+00 : f32
    %61 = vector.broadcast %cst_29 : f32 to vector<8x256xf32>
    %62 = arith.maximumf %60, %61 : vector<8x256xf32>
    %c0_30 = arith.constant 0 : index
    %c0_31 = arith.constant 0 : index
    %63 = vector.load %arg10[%c0_30, %c0_31] : memref<256x128xf32, #tpu.memory_space<vmem>>, vector<256x128xf32>
    %cst_32 = arith.constant dense<0.000000e+00> : vector<8x128xf32>
    %64 = tpu.matmul %62, %63, %cst_32 {dimension_numbers = #tpu.dot_dimension_numbers<[1], [0], [0], [1], [0, 0, 1, 1], [], []>} : vector<8x256xf32>, vector<256x128xf32>, vector<8x128xf32> -> vector<8x128xf32>
    %c0_33 = arith.constant 0 : index
    %c0_34 = arith.constant 0 : index
    %65 = vector.load %arg11[%c0_33, %c0_34] : memref<1x128xf32, #tpu.memory_space<vmem>>, vector<1x128xf32>
    %66 = vector.broadcast %65 : vector<1x128xf32> to vector<8x128xf32>
    %67 = arith.addf %64, %66 : vector<8x128xf32>
    %c0_35 = arith.constant 0 : index
    %c0_36 = arith.constant 0 : index
    %68 = vector.load %arg12[%c0_35, %c0_36] : memref<8x128xf32, #tpu.memory_space<vmem>>, vector<8x128xf32>
    tpu.vector_store %arg12[%c0_35, %c0_36], %67 {strides = array<i32>} : memref<8x128xf32, #tpu.memory_space<vmem>>, vector<8x128xf32>,
    return
  }
  func.func @transform_0(%arg0: i32) -> (i32, i32) {
    %c0_i32 = arith.constant 0 : i32
    %c0_i32_0 = arith.constant 0 : i32
    return %arg0, %c0_i32 : i32, i32
  }
  func.func @transform_1(%arg0: i32) -> (i32, i32) {
    %c0_i32 = arith.constant 0 : i32
    %c0_i32_0 = arith.constant 0 : i32
    %c0_i32_1 = arith.constant 0 : i32
    return %c0_i32, %c0_i32_0 : i32, i32
  }
  func.func @transform_2(%arg0: i32) -> (i32, i32) {
    %c0_i32 = arith.constant 0 : i32
    %c0_i32_0 = arith.constant 0 : i32
    %c0_i32_1 = arith.constant 0 : i32
    return %c0_i32, %c0_i32_0 : i32, i32
  }
  func.func @transform_3(%arg0: i32) -> (i32, i32) {
    %c0_i32 = arith.constant 0 : i32
    %c0_i32_0 = arith.constant 0 : i32
    %c0_i32_1 = arith.constant 0 : i32
    return %c0_i32, %c0_i32_0 : i32, i32
  }
  func.func @transform_4(%arg0: i32) -> (i32, i32) {
    %c0_i32 = arith.constant 0 : i32
    %c0_i32_0 = arith.constant 0 : i32
    %c0_i32_1 = arith.constant 0 : i32
    return %c0_i32, %c0_i32_0 : i32, i32
  }
  func.func @transform_5(%arg0: i32) -> (i32, i32) {
    %c0_i32 = arith.constant 0 : i32
    %c0_i32_0 = arith.constant 0 : i32
    %c0_i32_1 = arith.constant 0 : i32
    return %c0_i32, %c0_i32_0 : i32, i32
  }
  func.func @transform_6(%arg0: i32) -> (i32, i32) {
    %c0_i32 = arith.constant 0 : i32
    %c0_i32_0 = arith.constant 0 : i32
    %c0_i32_1 = arith.constant 0 : i32
    return %c0_i32, %c0_i32_0 : i32, i32
  }
  func.func @transform_7(%arg0: i32) -> (i32, i32) {
    %c0_i32 = arith.constant 0 : i32
    %c0_i32_0 = arith.constant 0 : i32
    %c0_i32_1 = arith.constant 0 : i32
    return %c0_i32, %c0_i32_0 : i32, i32
  }
  func.func @transform_8(%arg0: i32) -> (i32, i32) {
    %c0_i32 = arith.constant 0 : i32
    %c0_i32_0 = arith.constant 0 : i32
    %c0_i32_1 = arith.constant 0 : i32
    return %c0_i32, %c0_i32_0 : i32, i32
  }
  func.func @transform_9(%arg0: i32) -> (i32, i32) {
    %c0_i32 = arith.constant 0 : i32
    %c0_i32_0 = arith.constant 0 : i32
    %c0_i32_1 = arith.constant 0 : i32
    return %c0_i32, %c0_i32_0 : i32, i32
  }
  func.func @transform_10(%arg0: i32) -> (i32, i32) {
    %c0_i32 = arith.constant 0 : i32
    %c0_i32_0 = arith.constant 0 : i32
    %c0_i32_1 = arith.constant 0 : i32
    return %c0_i32, %c0_i32_0 : i32, i32
  }
  func.func @transform_11(%arg0: i32) -> (i32, i32) {
    %c0_i32 = arith.constant 0 : i32
    %c0_i32_0 = arith.constant 0 : i32
    return %arg0, %c0_i32 : i32, i32
  }
}

</mosaic_0001>

<llo_original>
// kernel: tpu_custom_call.1
$region0: #{tpu_custom_call.1}
  #allocation0 [shape = 'u32[]', space=smem, size = 0x4, offset = 0x4, fixed_abs, tag = 'smem constant byte address 0x4 - core index']
  #allocation1 [shape = 'u32[144,128]{1,0:T(1,128)}', space=vmem, size = 0x12000, scoped, tag = 'internal scratch']
  %s0 = inlined_call_operand.hbm [shape: f32[8,32], index: 0, kind: input, shape index: {}]
  %s1 = inlined_call_operand.hbm [shape: f32[32,256], index: 1, kind: input, shape index: {}]
  %s2 = inlined_call_operand.vmem [shape: f32[1,256], index: 2, kind: input, shape index: {}]
  %s3 = inlined_call_operand.vmem [shape: f32[1,256], index: 3, kind: input, shape index: {}]
  %s4 = inlined_call_operand.vmem [shape: f32[1,256], index: 4, kind: input, shape index: {}]
  %s5 = inlined_call_operand.hbm [shape: f32[256,256], index: 5, kind: input, shape index: {}]
  %s6 = inlined_call_operand.vmem [shape: f32[1,256], index: 6, kind: input, shape index: {}]
  %s7 = inlined_call_operand.vmem [shape: f32[1,256], index: 7, kind: input, shape index: {}]
  %s8 = inlined_call_operand.vmem [shape: f32[1,256], index: 8, kind: input, shape index: {}]
  %s9 = inlined_call_operand.hbm [shape: f32[256,128], index: 9, kind: input, shape index: {}]
  %s10 = inlined_call_operand.vmem [shape: f32[1,128], index: 10, kind: input, shape index: {}]
  %s11 = inlined_call_operand.hbm [shape: f32[8,128], index: 11, kind: output, shape index: {}]
  %s12 = sld [smem:[#allocation0]]
  $region70: #{tpu_custom_call.1} parent=0
    _
  %s14 = ssub.s32 1, %s12
  %s15 = scalar_select 0, %s14, %s12
  $region1: #{tpu_custom_call.1} parent=0
    #allocation2 [shape = 'u8[4096]{0}', space=vmem, size = 0x1000, scoped, tag = 'input window, operand 0, single buffered']
    #allocation3 [shape = 's32[1]{0}', space=sflag, size = 0x4, scoped, tag = 'scoped memory for tpu_custom_call.1']
    #allocation4 [shape = 's32[1]{0}', space=sflag, size = 0x4, scoped, tag = 'scoped memory for tpu_custom_call.1']
    #allocation5 [shape = 'u8[32768]{0}', space=vmem, size = 0x8000, scoped, tag = 'input window, operand 1, single buffered']
    #allocation6 [shape = 's32[1]{0}', space=sflag, size = 0x4, scoped, tag = 'scoped memory for tpu_custom_call.1']
    #allocation7 [shape = 'u8[262144]{0}', space=vmem, size = 0x40000, scoped, tag = 'input window, operand 5, single buffered']
    #allocation8 [shape = 'u8[131072]{0}', space=vmem, size = 0x20000, scoped, tag = 'input window, operand 9, single buffered']
    #allocation9 [shape = 's32[1]{0}', space=sflag, size = 0x4, scoped, tag = 'scoped memory for tpu_custom_call.1']
    #allocation10 [shape = 'u8[4096]{0}', space=vmem, size = 0x1000, scoped, tag = 'output window, operand 0, single buffered']
    %16 = vsyncpa [#allocation3], 0
    %17 = vsyncpa [#allocation6], 0
    %18 = vsyncpa [#allocation9], 0
    %19 = vsyncpa [#allocation4], 0
    // Predicated region
    $region2: #{tpu_custom_call.1} parent=1 // pred_check
      _
    $region3: #{tpu_custom_call.1} parent=1 // pred_check_branch
      %21 = sbr.rel (0) target = $region5
    $region4: #{tpu_custom_call.1} parent=1 // pred_region
      %s23 = ssub.s32 128, 128
      %24 = vsyncadd [#allocation3], %s23
      %s26 = sshll.u32 [#allocation2], 4
      %s27 = int_to_ptr.vmem [resolvable:$true] %s26
      %29 = dma.hbm_to_vmem [thread:$0]  %s0, 128, %s27, [#allocation3]
    $region5: #{tpu_custom_call.1} parent=1 // pred_fallthru
      _
    // Predicated region
    $region6: #{tpu_custom_call.1} parent=1 // pred_check
      _
    $region7: #{tpu_custom_call.1} parent=1 // pred_check_branch
      %31 = sbr.rel (0) target = $region9
    $region8: #{tpu_custom_call.1} parent=1 // pred_region
      %s33 = ssub.s32 1024, 1024
      %34 = vsyncadd [#allocation6], %s33
      %s35 = sshll.u32 [#allocation5], 4
      %s36 = int_to_ptr.vmem [resolvable:$true] %s35
      %41 = dma.hbm_to_vmem [thread:$0]  %s1, 1024, %s36, [#allocation6], 256, 256, 16
    $region9: #{tpu_custom_call.1} parent=1 // pred_fallthru
      _
    // Predicated region
    $region10: #{tpu_custom_call.1} parent=1 // pred_check
      _
    $region11: #{tpu_custom_call.1} parent=1 // pred_check_branch
      %43 = sbr.rel (0) target = $region13
    $region12: #{tpu_custom_call.1} parent=1 // pred_region
      _
    $region13: #{tpu_custom_call.1} parent=1 // pred_fallthru
      _
    // Predicated region
    $region14: #{tpu_custom_call.1} parent=1 // pred_check
      _
    $region15: #{tpu_custom_call.1} parent=1 // pred_check_branch
      %45 = sbr.rel (0) target = $region17
    $region16: #{tpu_custom_call.1} parent=1 // pred_region
      _
    $region17: #{tpu_custom_call.1} parent=1 // pred_fallthru
      _
    // Predicated region
    $region18: #{tpu_custom_call.1} parent=1 // pred_check
      _
    $region19: #{tpu_custom_call.1} parent=1 // pred_check_branch
      %47 = sbr.rel (0) target = $region21
    $region20: #{tpu_custom_call.1} parent=1 // pred_region
      _
    $region21: #{tpu_custom_call.1} parent=1 // pred_fallthru
      _
    // Predicated region
    $region22: #{tpu_custom_call.1} parent=1 // pred_check
      _
    $region23: #{tpu_custom_call.1} parent=1 // pred_check_branch
      %49 = sbr.rel (0) target = $region25
    $region24: #{tpu_custom_call.1} parent=1 // pred_region
      %s51 = ssub.s32 8192, 8192
      %52 = vsyncadd [#allocation6], %s51
      %s53 = sshll.u32 [#allocation7], 4
      %s54 = int_to_ptr.vmem [resolvable:$true] %s53
      %59 = dma.hbm_to_vmem [thread:$0]  %s5, 8192, %s54, [#allocation6], 256, 256, 16
    $region25: #{tpu_custom_call.1} parent=1 // pred_fallthru
      _
    // Predicated region
    $region26: #{tpu_custom_call.1} parent=1 // pred_check
      _
    $region27: #{tpu_custom_call.1} parent=1 // pred_check_branch
      %61 = sbr.rel (0) target = $region29
    $region28: #{tpu_custom_call.1} parent=1 // pred_region
      _
    $region29: #{tpu_custom_call.1} parent=1 // pred_fallthru
      _
    // Predicated region
    $region30: #{tpu_custom_call.1} parent=1 // pred_check
      _
    $region31: #{tpu_custom_call.1} parent=1 // pred_check_branch
      %63 = sbr.rel (0) target = $region33
    $region32: #{tpu_custom_call.1} parent=1 // pred_region
      _
    $region33: #{tpu_custom_call.1} parent=1 // pred_fallthru
      _
    // Predicated region
    $region34: #{tpu_custom_call.1} parent=1 // pred_check
      _
    $region35: #{tpu_custom_call.1} parent=1 // pred_check_branch
      %65 = sbr.rel (0) target = $region37
    $region36: #{tpu_custom_call.1} parent=1 // pred_region
      _
    $region37: #{tpu_custom_call.1} parent=1 // pred_fallthru
      _
    // Predicated region
    $region38: #{tpu_custom_call.1} parent=1 // pred_check
      _
    $region39: #{tpu_custom_call.1} parent=1 // pred_check_branch
      %67 = sbr.rel (0) target = $region41
    $region40: #{tpu_custom_call.1} parent=1 // pred_region
      %s69 = ssub.s32 4096, 4096
      %70 = vsyncadd [#allocation9], %s69
      %s71 = sshll.u32 [#allocation8], 4
      %s72 = int_to_ptr.vmem [resolvable:$true] %s71
      %77 = dma.hbm_to_vmem [thread:$0]  %s9, 4096, %s72, [#allocation9], 128, 128, 8
    $region41: #{tpu_custom_call.1} parent=1 // pred_fallthru
      _
    // Predicated region
    $region42: #{tpu_custom_call.1} parent=1 // pred_check
      _
    $region43: #{tpu_custom_call.1} parent=1 // pred_check_branch
      %79 = sbr.rel (0) target = $region45
    $region44: #{tpu_custom_call.1} parent=1 // pred_region
      _
    $region45: #{tpu_custom_call.1} parent=1 // pred_fallthru
      _
    // Predicated region
    $region46: #{tpu_custom_call.1} parent=1 // pred_check
      _
    $region47: #{tpu_custom_call.1} parent=1 // pred_check_branch
      %81 = sbr.rel (0) target = $region49
    $region48: #{tpu_custom_call.1} parent=1 // pred_region
      %82 = dma.done [#allocation3], 128
    $region49: #{tpu_custom_call.1} parent=1 // pred_fallthru
      _
    // Predicated region
    $region50: #{tpu_custom_call.1} parent=1 // pred_check
      _
    $region51: #{tpu_custom_call.1} parent=1 // pred_check_branch
      %84 = sbr.rel (0) target = $region53
    $region52: #{tpu_custom_call.1} parent=1 // pred_region
      %85 = dma.done [#allocation6], 1024
    $region53: #{tpu_custom_call.1} parent=1 // pred_fallthru
      _
    // Predicated region
    $region54: #{tpu_custom_call.1} parent=1 // pred_check
      _
    $region55: #{tpu_custom_call.1} parent=1 // pred_check_branch
      %87 = sbr.rel (0) target = $region57
    $region56: #{tpu_custom_call.1} parent=1 // pred_region
      %88 = dma.done [#allocation6], 8192
    $region57: #{tpu_custom_call.1} parent=1 // pred_fallthru
      _
    // Predicated region
    $region58: #{tpu_custom_call.1} parent=1 // pred_check
      _
    $region59: #{tpu_custom_call.1} parent=1 // pred_check_branch
      %90 = sbr.rel (0) target = $region61
    $region60: #{tpu_custom_call.1} parent=1 // pred_region
      %91 = dma.done [#allocation9], 4096
    $region61: #{tpu_custom_call.1} parent=1 // pred_fallthru
      _
    %v92 = vld [vmem:[#allocation2] sm:$0xff]
    %v93 = vld [vmem:[#allocation5] sm:$0xff]
    %v94 = vld [vmem:[#allocation5 + $0x8] sm:$0xff]
    %v95 = vld [vmem:[#allocation5 + $0x10] sm:$0xff]
    %v96 = vld [vmem:[#allocation5 + $0x18] sm:$0xff]
    %v97 = vld [vmem:[#allocation5 + $0x20] sm:$0xff]
    %v98 = vld [vmem:[#allocation5 + $0x28] sm:$0xff]
    %v99 = vld [vmem:[#allocation5 + $0x30] sm:$0xff]
    %v100 = vld [vmem:[#allocation5 + $0x38] sm:$0xff]
    %v101 = vld [vmem:[%s2] sm:$0x3]
    %v103 = vlaneseq
    %v104 = vshrl.u32 %v103, 7
    %v105 = vsub.s32 0, %v104
    %v106 = vrot.slane %v101, %v105
    %v107 = vlaneseq
    %v108 = vshrl.u32 %v107, 7
    %v109 = vsub.s32 1, %v108
    %v110 = vrot.slane %v101, %v109
    %vm113 = vcmask 261120
    %v115 = vsel %vm113, %v92, 0
    %117 = vmatprep.subr.mxu0 %v94
    %118 = vmatpush1.msra.mxu0 %v93
    %119 = vmatprep.subr.mxu0 %v96
    %120 = vmatpush1.msra.mxu0 %v95
    %121 = vmatprep.subr.mxu0 %v98
    %122 = vmatpush1.msra.mxu0 %v97
    %123 = vmatprep.subr.mxu0 %v100
    %124 = vmatpush1.msra.mxu0 %v99
    %125 = vmatprep.subr.mxu0 0.0
    %126 = vmatpush1.msra.mxu0 0.0
    %127 = vmatprep.subr.mxu0 0.0
    %128 = vmatpush1.msra.mxu0 0.0
    %129 = vmatprep.subr.mxu0 0.0
    %130 = vmatpush1.msra.mxu0 0.0
    %131 = vmatprep.subr.mxu0 0.0
    %132 = vmatpush1.msra.mxu0 0.0
    %133 = vmatprep.subr.mxu0 0.0
    %134 = vmatpush1.msra.mxu0 0.0
    %135 = vmatprep.subr.mxu0 0.0
    %136 = vmatpush1.msra.mxu0 0.0
    %137 = vmatprep.subr.mxu0 0.0
    %138 = vmatpush1.msra.mxu0 0.0
    %139 = vmatprep.subr.mxu0 0.0
    %140 = vmatpush1.msra.mxu0 0.0
    %141 = vmatprep.subr.mxu0 0.0
    %142 = vmatpush1.msra.mxu0 0.0
    %143 = vmatprep.subr.mxu0 0.0
    %144 = vmatpush1.msra.mxu0 0.0
    %145 = vmatprep.subr.mxu0 0.0
    %146 = vmatpush1.msra.mxu0 0.0
    %147 = vmatprep.subr.mxu0 0.0
    %148 = vmatpush1.msra.mxu0 0.0
    %149 = vmatprep.subr.mxu0 0.0
    %150 = vmatpush1.msra.mxu0 0.0
    %151 = vmatprep.subr.mxu0 0.0
    %152 = vmatpush1.msra.mxu0 0.0
    %153 = vmatprep.subr.mxu0 0.0
    %154 = vmatpush1.msra.mxu0 0.0
    %155 = vmatprep.subr.mxu0 0.0
    %156 = vmatpush1.msra.mxu0 0.0
    %157 = vmatprep.subr.mxu0 0.0
    %158 = vmatpush1.msra.mxu0 0.0
    %159 = vmatprep.subr.mxu0 0.0
    %160 = vmatpush1.msra.mxu0 0.0
    %161 = vmatprep.subr.mxu0 0.0
    %162 = vmatpush1.msra.mxu0 0.0
    %163 = vmatprep.subr.mxu0 0.0
    %164 = vmatpush1.msra.mxu0 0.0
    %165 = vmatprep.subr.mxu0 0.0
    %166 = vmatpush1.msra.mxu0 0.0
    %167 = vmatprep.subr.mxu0 0.0
    %168 = vmatpush1.msra.mxu0 0.0
    %169 = vmatprep.subr.mxu0 0.0
    %170 = vmatpush1.msra.mxu0 0.0
    %171 = vmatprep.subr.mxu0 0.0
    %172 = vmatpush1.msra.mxu0 0.0
    %173 = vmatprep.subr.mxu0 0.0
    %174 = vmatpush1.msra.mxu0 0.0
    %175 = vmatprep.subr.mxu0 0.0
    %176 = vmatpush1.msra.mxu0 0.0
    %177 = vmatprep.subr.mxu0 0.0
    %178 = vmatpush1.msra.mxu0 0.0
    %179 = vmatprep.subr.mxu0 0.0
    %180 = vmatpush1.msra.mxu0 0.0
    %181 = vmatprep.mubr.f32.mxu0 0.0
    %182 = vmatmul.mubr.f32.gmra.mrb[0].mxu0 %v115
    %v183 = vpop.f32.mrb[0].mxu0
    %v184 = vadd.f32 %v106, %v183
    %v185 = vpop.f32.mrb[0].mxu0
    %v186 = vadd.f32 %v110, %v185
    %187 = vdwg.mxu0
    %v188 = vld [vmem:[%s3] sm:$0x3]
    %v189 = vld [vmem:[%s4] sm:$0x3]
    %v190 = vadd.f32 %v184, %v186
    %191 = vadd.xlane.f32.xlu0 %v190
    %v192 = vpop.xlane.xlu0 %191
    %v193 = vrcp.pop 256.0
    %v194 = vmul.f32 %v192, %v193
    %v195 = vmul.f32 %v184, %v184
    %v196 = vmul.f32 %v186, %v186
    %v197 = vadd.f32 %v195, %v196
    %198 = vadd.xlane.f32.xlu0 %v197
    %v199 = vpop.xlane.xlu0 %198
    %v200 = vmul.f32 %v199, %v193
    %v201 = vmul.f32 %v194, %v194
    %v202 = vsub.f32 %v200, %v201
    %v203 = vadd.f32 %v202, 1e-05
    %v204 = vrsqrt.pop %v203
    %v205 = vsub.f32 %v184, %v194
    %v206 = vsub.f32 %v186, %v194
    %v208 = vlaneseq
    %v209 = vshrl.u32 %v208, 7
    %v210 = vsub.s32 0, %v209
    %v211 = vrot.slane %v188, %v210
    %v212 = vlaneseq
    %v213 = vshrl.u32 %v212, 7
    %v214 = vsub.s32 1, %v213
    %v215 = vrot.slane %v188, %v214
    %v218 = vmul.f32 %v204, %v211
    %v219 = vmul.f32 %v204, %v215
    %v220 = vmul.f32 %v205, %v218
    %v221 = vmul.f32 %v206, %v219
    %v223 = vlaneseq
    %v224 = vshrl.u32 %v223, 7
    %v225 = vsub.s32 0, %v224
    %v226 = vrot.slane %v189, %v225
    %v227 = vlaneseq
    %v228 = vshrl.u32 %v227, 7
    %v229 = vsub.s32 1, %v228
    %v230 = vrot.slane %v189, %v229
    %v233 = vadd.f32 %v220, %v226
    %v234 = vadd.f32 %v221, %v230
    %v235 = vmax.f32 %v233, 0.0
    %v236 = vmax.f32 %v234, 0.0
    %v237 = vld [vmem:[#allocation7] sm:$0xff]
    %v238 = vld [vmem:[#allocation7 + $0x8] sm:$0xff]
    %v239 = vld [vmem:[#allocation7 + $0x10] sm:$0xff]
    %v240 = vld [vmem:[#allocation7 + $0x18] sm:$0xff]
    %v241 = vld [vmem:[#allocation7 + $0x20] sm:$0xff]
    %v242 = vld [vmem:[#allocation7 + $0x28] sm:$0xff]
    %v243 = vld [vmem:[#allocation7 + $0x30] sm:$0xff]
    %v244 = vld [vmem:[#allocation7 + $0x38] sm:$0xff]
    %v245 = vld [vmem:[#allocation7 + $0x40] sm:$0xff]
    %v246 = vld [vmem:[#allocation7 + $0x48] sm:$0xff]
    %v247 = vld [vmem:[#allocation7 + $0x50] sm:$0xff]
    %v248 = vld [vmem:[#allocation7 + $0x58] sm:$0xff]
    %v249 = vld [vmem:[#allocation7 + $0x60] sm:$0xff]
    %v250 = vld [vmem:[#allocation7 + $0x68] sm:$0xff]
    %v251 = vld [vmem:[#allocation7 + $0x70] sm:$0xff]
    %v252 = vld [vmem:[#allocation7 + $0x78] sm:$0xff]
    %v253 = vld [vmem:[#allocation7 + $0x80] sm:$0xff]
    %v254 = vld [vmem:[#allocation7 + $0x88] sm:$0xff]
    %v255 = vld [vmem:[#allocation7 + $0x90] sm:$0xff]
    %v256 = vld [vmem:[#allocation7 + $0x98] sm:$0xff]
    %v257 = vld [vmem:[#allocation7 + $0xa0] sm:$0xff]
    %v258 = vld [vmem:[#allocation7 + $0xa8] sm:$0xff]
    %v259 = vld [vmem:[#allocation7 + $0xb0] sm:$0xff]
    %v260 = vld [vmem:[#allocation7 + $0xb8] sm:$0xff]
    %v261 = vld [vmem:[#allocation7 + $0xc0] sm:$0xff]
    %v262 = vld [vmem:[#allocation7 + $0xc8] sm:$0xff]
    %v263 = vld [vmem:[#allocation7 + $0xd0] sm:$0xff]
    %v264 = vld [vmem:[#allocation7 + $0xd8] sm:$0xff]
    %v265 = vld [vmem:[#allocation7 + $0xe0] sm:$0xff]
    %v266 = vld [vmem:[#allocation7 + $0xe8] sm:$0xff]
    %v267 = vld [vmem:[#allocation7 + $0xf0] sm:$0xff]
    %v268 = vld [vmem:[#allocation7 + $0xf8] sm:$0xff]
    %v269 = vld [vmem:[#allocation7 + $0x100] sm:$0xff]
    %v270 = vld [vmem:[#allocation7 + $0x108] sm:$0xff]
    %v271 = vld [vmem:[#allocation7 + $0x110] sm:$0xff]
    %v272 = vld [vmem:[#allocation7 + $0x118] sm:$0xff]
    %v273 = vld [vmem:[#allocation7 + $0x120] sm:$0xff]
    %v274 = vld [vmem:[#allocation7 + $0x128] sm:$0xff]
    %v275 = vld [vmem:[#allocation7 + $0x130] sm:$0xff]
    %v276 = vld [vmem:[#allocation7 + $0x138] sm:$0xff]
    %v277 = vld [vmem:[#allocation7 + $0x140] sm:$0xff]
    %v278 = vld [vmem:[#allocation7 + $0x148] sm:$0xff]
    %v279 = vld [vmem:[#allocation7 + $0x150] sm:$0xff]
    %v280 = vld [vmem:[#allocation7 + $0x158] sm:$0xff]
    %v281 = vld [vmem:[#allocation7 + $0x160] sm:$0xff]
    %v282 = vld [vmem:[#allocation7 + $0x168] sm:$0xff]
    %v283 = vld [vmem:[#allocation7 + $0x170] sm:$0xff]
    %v284 = vld [vmem:[#allocation7 + $0x178] sm:$0xff]
    %v285 = vld [vmem:[#allocation7 + $0x180] sm:$0xff]
    %v286 = vld [vmem:[#allocation7 + $0x188] sm:$0xff]
    %v287 = vld [vmem:[#allocation7 + $0x190] sm:$0xff]
    %v288 = vld [vmem:[#allocation7 + $0x198] sm:$0xff]
    %v289 = vld [vmem:[#allocation7 + $0x1a0] sm:$0xff]
    %v290 = vld [vmem:[#allocation7 + $0x1a8] sm:$0xff]
    %v291 = vld [vmem:[#allocation7 + $0x1b0] sm:$0xff]
    %v292 = vld [vmem:[#allocation7 + $0x1b8] sm:$0xff]
    %v293 = vld [vmem:[#allocation7 + $0x1c0] sm:$0xff]
    %v294 = vld [vmem:[#allocation7 + $0x1c8] sm:$0xff]
    %v295 = vld [vmem:[#allocation7 + $0x1d0] sm:$0xff]
    %v296 = vld [vmem:[#allocation7 + $0x1d8] sm:$0xff]
    %v297 = vld [vmem:[#allocation7 + $0x1e0] sm:$0xff]
    %v298 = vld [vmem:[#allocation7 + $0x1e8] sm:$0xff]
    %v299 = vld [vmem:[#allocation7 + $0x1f0] sm:$0xff]
    %v300 = vld [vmem:[#allocation7 + $0x1f8] sm:$0xff]
    %v301 = vld [vmem:[%s6] sm:$0x3]
    %v303 = vlaneseq
    %v304 = vshrl.u32 %v303, 7
    %v305 = vsub.s32 0, %v304
    %v306 = vrot.slane %v301, %v305
    %v307 = vlaneseq
    %v308 = vshrl.u32 %v307, 7
    %v309 = vsub.s32 1, %v308
    %v310 = vrot.slane %v301, %v309
    %313 = vmatprep.subr.mxu0 %v238
    %314 = vmatpush1.msra.mxu0 %v237
    %315 = vmatprep.subr.mxu0 %v240
    %316 = vmatpush1.msra.mxu0 %v239
    %317 = vmatprep.subr.mxu0 %v242
    %318 = vmatpush1.msra.mxu0 %v241
    %319 = vmatprep.subr.mxu0 %v244
    %320 = vmatpush1.msra.mxu0 %v243
    %321 = vmatprep.subr.mxu0 %v246
    %322 = vmatpush1.msra.mxu0 %v245
    %323 = vmatprep.subr.mxu0 %v248
    %324 = vmatpush1.msra.mxu0 %v247
    %325 = vmatprep.subr.mxu0 %v250
    %326 = vmatpush1.msra.mxu0 %v249
    %327 = vmatprep.subr.mxu0 %v252
    %328 = vmatpush1.msra.mxu0 %v251
    %329 = vmatprep.subr.mxu0 %v254
    %330 = vmatpush1.msra.mxu0 %v253
    %331 = vmatprep.subr.mxu0 %v256
    %332 = vmatpush1.msra.mxu0 %v255
    %333 = vmatprep.subr.mxu0 %v258
    %334 = vmatpush1.msra.mxu0 %v257
    %335 = vmatprep.subr.mxu0 %v260
    %336 = vmatpush1.msra.mxu0 %v259
    %337 = vmatprep.subr.mxu0 %v262
    %338 = vmatpush1.msra.mxu0 %v261
    %339 = vmatprep.subr.mxu0 %v264
    %340 = vmatpush1.msra.mxu0 %v263
    %341 = vmatprep.subr.mxu0 %v266
    %342 = vmatpush1.msra.mxu0 %v265
    %343 = vmatprep.subr.mxu0 %v268
    %344 = vmatpush1.msra.mxu0 %v267
    %345 = vmatprep.subr.mxu0 %v270
    %346 = vmatpush1.msra.mxu0 %v269
    %347 = vmatprep.subr.mxu0 %v272
    %348 = vmatpush1.msra.mxu0 %v271
    %349 = vmatprep.subr.mxu0 %v274
    %350 = vmatpush1.msra.mxu0 %v273
    %351 = vmatprep.subr.mxu0 %v276
    %352 = vmatpush1.msra.mxu0 %v275
    %353 = vmatprep.subr.mxu0 %v278
    %354 = vmatpush1.msra.mxu0 %v277
    %355 = vmatprep.subr.mxu0 %v280
    %356 = vmatpush1.msra.mxu0 %v279
    %357 = vmatprep.subr.mxu0 %v282
    %358 = vmatpush1.msra.mxu0 %v281
    %359 = vmatprep.subr.mxu0 %v284
    %360 = vmatpush1.msra.mxu0 %v283
    %361 = vmatprep.subr.mxu0 %v286
    %362 = vmatpush1.msra.mxu0 %v285
    %363 = vmatprep.subr.mxu0 %v288
    %364 = vmatpush1.msra.mxu0 %v287
    %365 = vmatprep.subr.mxu0 %v290
    %366 = vmatpush1.msra.mxu0 %v289
    %367 = vmatprep.subr.mxu0 %v292
    %368 = vmatpush1.msra.mxu0 %v291
    %369 = vmatprep.subr.mxu0 %v294
    %370 = vmatpush1.msra.mxu0 %v293
    %371 = vmatprep.subr.mxu0 %v296
    %372 = vmatpush1.msra.mxu0 %v295
    %373 = vmatprep.subr.mxu0 %v298
    %374 = vmatpush1.msra.mxu0 %v297
    %375 = vmatprep.subr.mxu0 %v300
    %376 = vmatpush1.msra.mxu0 %v299
    %377 = vmatprep.mubr.f32.mxu0 %v236
    %378 = vmatmul.mubr.f32.gmra.mrb[0].mxu0 %v235
    %v379 = vpop.f32.mrb[0].mxu0
    %v380 = vadd.f32 %v306, %v379
    %v381 = vpop.f32.mrb[0].mxu0
    %v382 = vadd.f32 %v310, %v381
    %383 = vdwg.mxu0
    %v384 = vld [vmem:[%s7] sm:$0x3]
    %v385 = vld [vmem:[%s8] sm:$0x3]
    %v386 = vadd.f32 %v380, %v382
    %387 = vadd.xlane.f32.xlu0 %v386
    %v388 = vpop.xlane.xlu0 %387
    %v389 = vmul.f32 %v388, %v193
    %v390 = vmul.f32 %v380, %v380
    %v391 = vmul.f32 %v382, %v382
    %v392 = vadd.f32 %v390, %v391
    %393 = vadd.xlane.f32.xlu0 %v392
    %v394 = vpop.xlane.xlu0 %393
    %v395 = vmul.f32 %v394, %v193
    %v396 = vmul.f32 %v389, %v389
    %v397 = vsub.f32 %v395, %v396
    %v398 = vadd.f32 %v397, 1e-05
    %v399 = vrsqrt.pop %v398
    %v400 = vsub.f32 %v380, %v389
    %v401 = vsub.f32 %v382, %v389
    %v403 = vlaneseq
    %v404 = vshrl.u32 %v403, 7
    %v405 = vsub.s32 0, %v404
    %v406 = vrot.slane %v384, %v405
    %v407 = vlaneseq
    %v408 = vshrl.u32 %v407, 7
    %v409 = vsub.s32 1, %v408
    %v410 = vrot.slane %v384, %v409
    %v413 = vmul.f32 %v399, %v406
    %v414 = vmul.f32 %v399, %v410
    %v415 = vmul.f32 %v400, %v413
    %v416 = vmul.f32 %v401, %v414
    %v418 = vlaneseq
    %v419 = vshrl.u32 %v418, 7
    %v420 = vsub.s32 0, %v419
    %v421 = vrot.slane %v385, %v420
    %v422 = vlaneseq
    %v423 = vshrl.u32 %v422, 7
    %v424 = vsub.s32 1, %v423
    %v425 = vrot.slane %v385, %v424
    %v428 = vadd.f32 %v415, %v421
    %v429 = vadd.f32 %v416, %v425
    %v430 = vmax.f32 %v428, 0.0
    %v431 = vmax.f32 %v429, 0.0
    %v432 = vld [vmem:[#allocation8] sm:$0xff]
    %v433 = vld [vmem:[#allocation8 + $0x8] sm:$0xff]
    %v434 = vld [vmem:[#allocation8 + $0x10] sm:$0xff]
    %v435 = vld [vmem:[#allocation8 + $0x18] sm:$0xff]
    %v436 = vld [vmem:[#allocation8 + $0x20] sm:$0xff]
    %v437 = vld [vmem:[#allocation8 + $0x28] sm:$0xff]
    %v438 = vld [vmem:[#allocation8 + $0x30] sm:$0xff]
    %v439 = vld [vmem:[#allocation8 + $0x38] sm:$0xff]
    %v440 = vld [vmem:[#allocation8 + $0x40] sm:$0xff]
    %v441 = vld [vmem:[#allocation8 + $0x48] sm:$0xff]
    %v442 = vld [vmem:[#allocation8 + $0x50] sm:$0xff]
    %v443 = vld [vmem:[#allocation8 + $0x58] sm:$0xff]
    %v444 = vld [vmem:[#allocation8 + $0x60] sm:$0xff]
    %v445 = vld [vmem:[#allocation8 + $0x68] sm:$0xff]
    %v446 = vld [vmem:[#allocation8 + $0x70] sm:$0xff]
    %v447 = vld [vmem:[#allocation8 + $0x78] sm:$0xff]
    %v448 = vld [vmem:[#allocation8 + $0x80] sm:$0xff]
    %v449 = vld [vmem:[#allocation8 + $0x88] sm:$0xff]
    %v450 = vld [vmem:[#allocation8 + $0x90] sm:$0xff]
    %v451 = vld [vmem:[#allocation8 + $0x98] sm:$0xff]
    %v452 = vld [vmem:[#allocation8 + $0xa0] sm:$0xff]
    %v453 = vld [vmem:[#allocation8 + $0xa8] sm:$0xff]
    %v454 = vld [vmem:[#allocation8 + $0xb0] sm:$0xff]
    %v455 = vld [vmem:[#allocation8 + $0xb8] sm:$0xff]
    %v456 = vld [vmem:[#allocation8 + $0xc0] sm:$0xff]
    %v457 = vld [vmem:[#allocation8 + $0xc8] sm:$0xff]
    %v458 = vld [vmem:[#allocation8 + $0xd0] sm:$0xff]
    %v459 = vld [vmem:[#allocation8 + $0xd8] sm:$0xff]
    %v460 = vld [vmem:[#allocation8 + $0xe0] sm:$0xff]
    %v461 = vld [vmem:[#allocation8 + $0xe8] sm:$0xff]
    %v462 = vld [vmem:[#allocation8 + $0xf0] sm:$0xff]
    %v463 = vld [vmem:[#allocation8 + $0xf8] sm:$0xff]
    %v464 = vld [vmem:[%s10] sm:$0x1]
    %v466 = vlaneseq
    %v467 = vshrl.u32 %v466, 7
    %v468 = vsub.s32 0, %v467
    %v469 = vrot.slane %v464, %v468
    %471 = vmatprep.subr.mxu0 0.0
    %472 = vmatpush1.msra.mxu0 %v432
    %473 = vmatprep.subr.mxu0 0.0
    %474 = vmatpush1.msra.mxu0 %v433
    %475 = vmatprep.subr.mxu0 0.0
    %476 = vmatpush1.msra.mxu0 %v434
    %477 = vmatprep.subr.mxu0 0.0
    %478 = vmatpush1.msra.mxu0 %v435
    %479 = vmatprep.subr.mxu0 0.0
    %480 = vmatpush1.msra.mxu0 %v436
    %481 = vmatprep.subr.mxu0 0.0
    %482 = vmatpush1.msra.mxu0 %v437
    %483 = vmatprep.subr.mxu0 0.0
    %484 = vmatpush1.msra.mxu0 %v438
    %485 = vmatprep.subr.mxu0 0.0
    %486 = vmatpush1.msra.mxu0 %v439
    %487 = vmatprep.subr.mxu0 0.0
    %488 = vmatpush1.msra.mxu0 %v440
    %489 = vmatprep.subr.mxu0 0.0
    %490 = vmatpush1.msra.mxu0 %v441
    %491 = vmatprep.subr.mxu0 0.0
    %492 = vmatpush1.msra.mxu0 %v442
    %493 = vmatprep.subr.mxu0 0.0
    %494 = vmatpush1.msra.mxu0 %v443
    %495 = vmatprep.subr.mxu0 0.0
    %496 = vmatpush1.msra.mxu0 %v444
    %497 = vmatprep.subr.mxu0 0.0
    %498 = vmatpush1.msra.mxu0 %v445
    %499 = vmatprep.subr.mxu0 0.0
    %500 = vmatpush1.msra.mxu0 %v446
    %501 = vmatprep.subr.mxu0 0.0
    %502 = vmatpush1.msra.mxu0 %v447
    %503 = vmatprep.subr.mxu0 0.0
    %504 = vmatpush1.msra.mxu0 %v448
    %505 = vmatprep.subr.mxu0 0.0
    %506 = vmatpush1.msra.mxu0 %v449
    %507 = vmatprep.subr.mxu0 0.0
    %508 = vmatpush1.msra.mxu0 %v450
    %509 = vmatprep.subr.mxu0 0.0
    %510 = vmatpush1.msra.mxu0 %v451
    %511 = vmatprep.subr.mxu0 0.0
    %512 = vmatpush1.msra.mxu0 %v452
    %513 = vmatprep.subr.mxu0 0.0
    %514 = vmatpush1.msra.mxu0 %v453
    %515 = vmatprep.subr.mxu0 0.0
    %516 = vmatpush1.msra.mxu0 %v454
    %517 = vmatprep.subr.mxu0 0.0
    %518 = vmatpush1.msra.mxu0 %v455
    %519 = vmatprep.subr.mxu0 0.0
    %520 = vmatpush1.msra.mxu0 %v456
    %521 = vmatprep.subr.mxu0 0.0
    %522 = vmatpush1.msra.mxu0 %v457
    %523 = vmatprep.subr.mxu0 0.0
    %524 = vmatpush1.msra.mxu0 %v458
    %525 = vmatprep.subr.mxu0 0.0
    %526 = vmatpush1.msra.mxu0 %v459
    %527 = vmatprep.subr.mxu0 0.0
    %528 = vmatpush1.msra.mxu0 %v460
    %529 = vmatprep.subr.mxu0 0.0
    %530 = vmatpush1.msra.mxu0 %v461
    %531 = vmatprep.subr.mxu0 0.0
    %532 = vmatpush1.msra.mxu0 %v462
    %533 = vmatprep.subr.mxu0 0.0
    %534 = vmatpush1.msra.mxu0 %v463
    %535 = vmatprep.mubr.f32.mxu0 %v431
    %536 = vmatmul.mubr.f32.gmra.mrb[0].mxu0 %v430
    %v537 = vpop.f32.mrb[0].mxu0
    %v538 = vadd.f32 %v469, %v537
    %v539 = vpop.f32.mrb[0].mxu0
    %540 = vdwg.mxu0
    %541 = vst [vmem:[#allocation10] sm:$0xff] %v538
    // Predicated region
    $region62: #{tpu_custom_call.1} parent=1 // pred_check
      _
    $region63: #{tpu_custom_call.1} parent=1 // pred_check_branch
      %543 = sbr.rel (0) target = $region65
    $region64: #{tpu_custom_call.1} parent=1 // pred_region
      %s545 = ssub.s32 128, 128
      %546 = vsyncadd [#allocation4], %s545
      %s548 = sshll.u32 [#allocation10], 4
      %s549 = int_to_ptr.vmem [resolvable:$true] %s548
      %551 = dma.vmem_to_hbm [thread:$0]  %s549, 128, %s11, [#allocation4]
    $region65: #{tpu_custom_call.1} parent=1 // pred_fallthru
      _
    // Predicated region
    $region66: #{tpu_custom_call.1} parent=1 // pred_check
      _
    $region67: #{tpu_custom_call.1} parent=1 // pred_check_branch
      %553 = sbr.rel (0) target = $region69
    $region68: #{tpu_custom_call.1} parent=1 // pred_region
      %554 = dma.done [#allocation4], 128
    $region69: #{tpu_custom_call.1} parent=1 // pred_fallthru
      _
    %555 = vsyncpa [#allocation3], 1
    %556 = vsyncpa [#allocation6], 1
    %557 = vsyncpa [#allocation9], 1
    %558 = vsyncpa [#allocation4], 1

</llo_original>
